<compile_context>
chip_gen: v7x
topology: tpu7x:2x2x1
jax: 0.10.0
libtpu: 0.0.40
codegen_flags: <defaults>
</compile_context>

<pallas_src>
import numpy as np
import jax
import jax.numpy as jnp
from jax.experimental import pallas as pl
from jax.experimental.pallas import tpu as pltpu


def _round_up(v, m):
    return ((v + m - 1) // m) * m


def _pick_tile(dim, max_tile, align):
    """Largest multiple of `align` <= max_tile that divides `dim` (dim % align == 0)."""
    if dim <= max_tile:
        return dim
    t = (max_tile // align) * align
    while t > align and dim % t != 0:
        t -= align
    return t


def _tpu_vmem_config():
    """Returns (tile_budget_bytes, vmem_limit_bytes, is_small_vmem_chip)."""
    try:
        cap = int(pltpu.get_tpu_info().vmem_capacity_bytes)
    except Exception:
        cap = 64 * 1024 * 1024  # conservative fallback (v7x-sized)
    if cap >= 96 * 1024 * 1024:
        # v5e / v6e: 128 MiB physical VMEM, single TensorCore.
        return 64 * 1024 * 1024, 96 * 1024 * 1024, False
    # v7x: 64 MiB physical VMEM per TC, 2 TensorCores.
    return 36 * 1024 * 1024, 48 * 1024 * 1024, True


# ---------------------------------------------------------------------------
# Kernels
# ---------------------------------------------------------------------------

def _readout_mean_kernel(xs_ref, w_ref, scale_ref, b_ref, o_ref, acc_ref):
    # xs_ref:(tm,tk) time-pre-summed activations; w_ref:(tk,tn)
    # scale_ref/b_ref:(1,tn) f32; o_ref:(tm,tn); acc_ref:(tm,tn) f32 scratch
    # (resident across the K grid axis).
    k = pl.program_id(2)
    part = jnp.dot(xs_ref[...], w_ref[...], preferred_element_type=jnp.float32)

    @pl.when(k == 0)
    def _():
        acc_ref[...] = part            # first K step writes (no zero-fill pass)

    @pl.when(k > 0)
    def _():
        acc_ref[...] += part

    @pl.when(k == pl.num_programs(2) - 1)
    def _():
        # scale already contains 1/T and 1/(norm+eps).
        o_ref[...] = (acc_ref[...] * scale_ref[...] - b_ref[...]).astype(o_ref.dtype)


def _readout_max_kernel(x_ref, w_ref, scale_ref, b_ref, beta_ref, o_ref, acc_ref):
    # x_ref:(T,tm,tk) time-major; w_ref:(tk,tn); scale_ref/b_ref:(1,tn) f32;
    # beta_ref:(1,) SMEM; o_ref:(tm,tn); acc_ref:(T*tm,tn) f32 scratch resident
    # across K steps (holds h for this (B,N) tile).
    k = pl.program_id(2)
    tsteps, tm, tk = x_ref.shape

    # (T,tm,tk) -> (T*tm,tk) merge is layout-preserving because tm % 8 == 0.
    x2 = x_ref[...].reshape(tsteps * tm, tk)
    part = jnp.dot(x2, w_ref[...], preferred_element_type=jnp.float32)

    @pl.when(k == 0)
    def _():
        acc_ref[...] = part

    @pl.when(k > 0)
    def _():
        acc_ref[...] += part

    @pl.when(k == pl.num_programs(2) - 1)
    def _():
        beta = beta_ref[0]
        # (1 - beta) is folded into `scale` in the wrapper:
        #   mem_t = beta*mem_{t-1} + (1-beta)*h_t  ==  (1-beta) * m'_t,
        #   m'_t  = beta*m'_{t-1} + h_t  with m'_0 = h_0,
        # and since beta in [0,1], max_t commutes with the (1-beta) scaling.
        mem = acc_ref[pl.ds(0, tm), :]          # whole (8,128) tiles, static offsets
        mx = mem
        for t in range(1, tsteps):              # static unroll over time
            mem = mem * beta + acc_ref[pl.ds(t * tm, tm), :]
            mx = jnp.maximum(mx, mem)
        o_ref[...] = (mx * scale_ref[...] - b_ref[...]).astype(o_ref.dtype)


# ---------------------------------------------------------------------------
# Wrapper
# ---------------------------------------------------------------------------

def readout_layer_forward(x, w, b, *, time_reduction="mean", beta=None, eps=1e-8):
    """Pallas forward of ReadoutLayer.  x:(B,T,F), w:(F,N), b:(N,). Returns (out, None)."""
    assert time_reduction in ("mean", "max")
    B, T, K = x.shape
    Kw, N = w.shape
    assert Kw == K and b.shape == (N,)

    out_dtype = x.dtype
    in_itemsize = jnp.dtype(x.dtype).itemsize
    w_itemsize = jnp.dtype(w.dtype).itemsize
    out_itemsize = jnp.dtype(out_dtype).itemsize

    budget, vmem_limit, is_small_vmem = _tpu_vmem_config()

    # Hoisted epilogue scale (f32): 1/(norm + eps); fold 1/T ('mean') or (1-beta) ('max').
    w32 = w.astype(jnp.float32)
    norm = jnp.sum(w32 * w32, axis=0)                          # (N,)
    scale = 1.0 / (norm + eps)
    if time_reduction == "mean":
        scale = scale / T
        beta_arr = None
    else:
        assert beta is not None, "time_reduction='max' requires beta"
        beta_arr = jnp.asarray(beta, dtype=jnp.float32).reshape(1)
        scale = scale * (1.0 - beta_arr[0])

    # Pad to TPU-friendly shapes: lane-dense N, 128-aligned K, 8-aligned B.
    N_pad = _round_up(N, 128)
    K_pad = _round_up(K, 128)
    B_pad = _round_up(B, 8)

    scale_p = jnp.pad(scale, (0, N_pad - N)).reshape(1, N_pad).astype(jnp.float32)
    b_p = jnp.pad(b.astype(jnp.float32), (0, N_pad - N)).reshape(1, N_pad)
    w_p = w if (K_pad == K and N_pad == N) else jnp.pad(
        w, ((0, K_pad - K), (0, N_pad - N)))

    # Tile sizes (generation-aware VMEM budget, double-buffering accounted).
    tk = _pick_tile(K_pad, 512, 128)
    tn = _pick_tile(N_pad, 256 if is_small_vmem else 512, 128)
    fixed = 2 * tk * tn * w_itemsize + 4 * 2 * tn * 4          # w blocks + scale/b blocks

    w_spec = pl.BlockSpec((tk, tn), lambda i, j, k: (k, j))
    vec_spec = pl.BlockSpec((1, tn), lambda i, j, k: (0, j))
    out_spec = pl.BlockSpec((tm_ := None, tn), None)           # placeholder, rebuilt below
    del out_spec, tm_

    compiler_params = pltpu.CompilerParams(
        dimension_semantics=("parallel", "parallel", "arbitrary"),
        vmem_limit_bytes=vmem_limit,
    )

    if time_reduction == "mean":
        # Pre-reduce the time axis in the wrapper (f32 accumulate); the kernel
        # then streams a T-fold smaller (B,K) operand exactly once per j tile.
        x_sum = jnp.sum(x, axis=1, dtype=jnp.float32).astype(x.dtype)   # (B, K)
        x_p = x_sum if (B_pad == B and K_pad == K) else jnp.pad(
            x_sum, ((0, B_pad - B), (0, K_pad - K)))

        per_row = 2 * tk * in_itemsize + 2 * tn * out_itemsize + tn * 4
        tm_cap = max(8, min(1024, ((budget - fixed) // per_row) // 8 * 8))
        tm = _pick_tile(B_pad, tm_cap, 8)
        if is_small_vmem and B_pad // tm == 1 and N_pad // tn == 1:
            # v7x megacore: make sure a 'parallel' axis has >= 2 blocks.
            if B_pad >= 16:
                tm = _pick_tile(B_pad, max(8, (B_pad // 2) // 8 * 8), 8)
            elif tn > 128:
                tn = 128

        grid = (B_pad // tm, N_pad // tn, K_pad // tk)
        out_p = pl.pallas_call(
            _readout_mean_kernel,
            out_shape=jax.ShapeDtypeStruct((B_pad, N_pad), out_dtype),
            grid=grid,
            in_specs=[pl.BlockSpec((tm, tk), lambda i, j, k: (i, k)),
                      w_spec, vec_spec, vec_spec],
            out_specs=pl.BlockSpec((tm, tn), lambda i, j, k: (i, j)),
            scratch_shapes=[pltpu.VMEM((tm, tn), jnp.float32)],
            compiler_params=compiler_params,
        )(x_p, w_p, scale_p, b_p)
    else:
        # Time-major layout: (T, B, K) so the in-kernel (T,tm,tk)->(T*tm,tk)
        # merge and the per-t epilogue slices are layout-preserving.
        x_tm = jnp.transpose(x, (1, 0, 2))                                # (T, B, K)
        x_p = x_tm if (B_pad == B and K_pad == K) else jnp.pad(
            x_tm, ((0, 0), (0, B_pad - B), (0, K_pad - K)))

        per_row = 2 * T * tk * in_itemsize + 2 * tn * out_itemsize + T * tn * 4
        tm_cap = max(8, min(512, ((budget - fixed) // per_row) // 8 * 8))
        tm = _pick_tile(B_pad, tm_cap, 8)
        if is_small_vmem and B_pad // tm == 1 and N_pad // tn == 1:
            if B_pad >= 16:
                tm = _pick_tile(B_pad, max(8, (B_pad // 2) // 8 * 8), 8)
            elif tn > 128:
                tn = 128

        grid = (B_pad // tm, N_pad // tn, K_pad // tk)
        out_p = pl.pallas_call(
            _readout_max_kernel,
            out_shape=jax.ShapeDtypeStruct((B_pad, N_pad), out_dtype),
            grid=grid,
            in_specs=[pl.BlockSpec((T, tm, tk), lambda i, j, k: (0, i, k)),
                      w_spec, vec_spec, vec_spec,
                      pl.BlockSpec(memory_space=pltpu.MemorySpace.SMEM)],
            out_specs=pl.BlockSpec((tm, tn), lambda i, j, k: (i, j)),
            scratch_shapes=[pltpu.VMEM((T * tm, tn), jnp.float32)],
            compiler_params=compiler_params,
        )(x_p, w_p, scale_p, b_p, beta_arr)

    out = out_p[:B, :N]
    return out, None           # loss is always None in the reference forward


# ---------------------------------------------------------------------------
# Pure-JAX reference (mirrors the PyTorch module)
# ---------------------------------------------------------------------------

def _reference_forward(x, w, b, *, time_reduction="mean", beta=None, eps=1e-8):
    x32 = x.astype(jnp.float32)
    w32 = w.astype(jnp.float32)
    h = jnp.einsum("abc,cd->abd", x32, w32)
    norm = (w32 ** 2).sum(0)
    if time_reduction == "mean":
        out = jnp.mean(h, axis=1) / (norm + eps) - b
    else:
        Bn, T, N = h.shape
        mem = jnp.zeros((Bn, N), jnp.float32)
        mx = jnp.full((Bn, N), -jnp.inf, jnp.float32)
        for t in range(T):
            mem = mem * beta + (1.0 - beta) * h[:, t, :]
            mx = jnp.maximum(mx, mem)
        out = mx / (norm + eps) - b
    return out.astype(x.dtype)


if __name__ == "__main__":
    # Small shapes consistent with the module: x is (batch, nb_steps, input_shape).
    batch = 8
    nb_steps = 8
    input_shape = 1024         # -> two 512-wide K tiles (exercises the K accumulator)
    output_shape = 20          # -> padded to 128 lanes inside the wrapper
    w_init_mean = 0.0
    w_init_std = 0.2

    key = jax.random.PRNGKey(0)
    kx, kw, kb, kbeta = jax.random.split(key, 4)

    # reset_parameters(): w ~ N(mean, std*sqrt(1/input_shape)), b ~ N(1, 0.01),
    # beta ~ N(0.7, 0.01) then clamp()ed to [0, 1] (beta only used for 'max').
    w = w_init_mean + w_init_std * np.sqrt(1.0 / input_shape) * jax.random.normal(
        kw, (input_shape, output_shape), dtype=jnp.float32)
    b = 1.0 + 0.01 * jax.random.normal(kb, (output_shape,), dtype=jnp.float32)
    beta = jnp.clip(0.7 + 0.01 * jax.random.normal(kbeta, (1,), dtype=jnp.float32),
                    0.0, 1.0)

    x = jax.random.normal(kx, (batch, nb_steps, input_shape), dtype=jnp.float32)

    # time_reduction='mean' (module default)
    out_mean, loss = readout_layer_forward(x, w, b, time_reduction="mean")
    out_mean = jax.block_until_ready(out_mean)
    ref_mean = _reference_forward(x, w, b, time_reduction="mean")
    np.testing.assert_allclose(np.asarray(out_mean), np.asarray(ref_mean),
                               rtol=1e-4, atol=1e-4)
    assert loss is None

    # time_reduction='max' (beta-gated membrane + max over time)
    out_max, _ = readout_layer_forward(x, w, b, time_reduction="max", beta=beta)
    out_max = jax.block_until_ready(out_max)
    ref_max = _reference_forward(x, w, b, time_reduction="max", beta=float(beta[0]))
    np.testing.assert_allclose(np.asarray(out_max), np.asarray(ref_max),
                               rtol=1e-4, atol=1e-4)

    print("KERNEL_OK")
</pallas_src>

<mosaic_0001>
module attributes {stable_mosaic.version = 11 : i64} {
  func.func @_readout_mean_kernel(%arg0: i32, %arg1: i32, %arg2: i32, %arg3: memref<8x512xf32, #tpu.memory_space<vmem>>, %arg4: memref<512x128xf32, #tpu.memory_space<vmem>>, %arg5: memref<1x128xf32, #tpu.memory_space<vmem>>, %arg6: memref<1x128xf32, #tpu.memory_space<vmem>>, %arg7: memref<8x128xf32, #tpu.memory_space<vmem>>, %arg8: memref<8x128xf32, #tpu.memory_space<vmem>>) attributes {dimension_semantics = [#tpu.dimension_semantics<parallel>, #tpu.dimension_semantics<parallel>, #tpu.dimension_semantics<arbitrary>], iteration_bounds = array<i64: 1, 1, 2>, scalar_prefetch = 0 : i64, scratch_operands = 1 : i64, tpu.core_type = #tpu.core_type<tc>, window_params = [{transform_indices = @transform_0, window_bounds = array<i64: 8, 512>}, {transform_indices = @transform_1, window_bounds = array<i64: 512, 128>}, {transform_indices = @transform_2, window_bounds = array<i64: 1, 128>}, {transform_indices = @transform_3, window_bounds = array<i64: 1, 128>}, {transform_indices = @transform_4, window_bounds = array<i64: 8, 128>}]} {
    %c0 = arith.constant 0 : index
    %c0_0 = arith.constant 0 : index
    %0 = vector.load %arg3[%c0, %c0_0] : memref<8x512xf32, #tpu.memory_space<vmem>>, vector<8x512xf32>
    %c0_1 = arith.constant 0 : index
    %c0_2 = arith.constant 0 : index
    %1 = vector.load %arg4[%c0_1, %c0_2] : memref<512x128xf32, #tpu.memory_space<vmem>>, vector<512x128xf32>
    %cst = arith.constant dense<0.000000e+00> : vector<8x128xf32>
    %2 = tpu.matmul %0, %1, %cst {dimension_numbers = #tpu.dot_dimension_numbers<[1], [0], [0], [1], [0, 0, 1, 1], [], []>} : vector<8x512xf32>, vector<512x128xf32>, vector<8x128xf32> -> vector<8x128xf32>
    %c0_i32 = arith.constant 0 : i32
    %3 = arith.cmpi eq, %arg2, %c0_i32 : i32
    %4 = arith.extui %3 : i1 to i32
    %c0_i32_3 = arith.constant 0 : i32
    %5 = arith.cmpi ne, %4, %c0_i32_3 : i32
    scf.if %5 {
      %c0_7 = arith.constant 0 : index
      %c0_8 = arith.constant 0 : index
      %12 = vector.load %arg8[%c0_7, %c0_8] : memref<8x128xf32, #tpu.memory_space<vmem>>, vector<8x128xf32>
      tpu.vector_store %arg8[%c0_7, %c0_8], %2 {strides = array<i32>} : memref<8x128xf32, #tpu.memory_space<vmem>>, vector<8x128xf32>,
    } else {
    }
    %c0_i32_4 = arith.constant 0 : i32
    %6 = arith.cmpi sgt, %arg2, %c0_i32_4 : i32
    %7 = arith.extui %6 : i1 to i32
    %c0_i32_5 = arith.constant 0 : i32
    %8 = arith.cmpi ne, %7, %c0_i32_5 : i32
    scf.if %8 {
      %c0_7 = arith.constant 0 : index
      %c0_8 = arith.constant 0 : index
      %12 = vector.load %arg8[%c0_7, %c0_8] : memref<8x128xf32, #tpu.memory_space<vmem>>, vector<8x128xf32>
      %13 = arith.addf %12, %2 : vector<8x128xf32>
      %c0_9 = arith.constant 0 : index
      %c0_10 = arith.constant 0 : index
      %14 = vector.load %arg8[%c0_9, %c0_10] : memref<8x128xf32, #tpu.memory_space<vmem>>, vector<8x128xf32>
      tpu.vector_store %arg8[%c0_9, %c0_10], %13 {strides = array<i32>} : memref<8x128xf32, #tpu.memory_space<vmem>>, vector<8x128xf32>,
    } else {
    }
    %c1_i32 = arith.constant 1 : i32
    %9 = arith.cmpi eq, %arg2, %c1_i32 : i32
    %10 = arith.extui %9 : i1 to i32
    %c0_i32_6 = arith.constant 0 : i32
    %11 = arith.cmpi ne, %10, %c0_i32_6 : i32
    scf.if %11 {
      %c0_7 = arith.constant 0 : index
      %c0_8 = arith.constant 0 : index
      %12 = vector.load %arg8[%c0_7, %c0_8] : memref<8x128xf32, #tpu.memory_space<vmem>>, vector<8x128xf32>
      %c0_9 = arith.constant 0 : index
      %c0_10 = arith.constant 0 : index
      %13 = vector.load %arg5[%c0_9, %c0_10] : memref<1x128xf32, #tpu.memory_space<vmem>>, vector<1x128xf32>
      %14 = vector.broadcast %13 : vector<1x128xf32> to vector<8x128xf32>
      %15 = arith.mulf %12, %14 : vector<8x128xf32>
      %c0_11 = arith.constant 0 : index
      %c0_12 = arith.constant 0 : index
      %16 = vector.load %arg6[%c0_11, %c0_12] : memref<1x128xf32, #tpu.memory_space<vmem>>, vector<1x128xf32>
      %17 = vector.broadcast %16 : vector<1x128xf32> to vector<8x128xf32>
      %18 = arith.subf %15, %17 : vector<8x128xf32>
      %c0_13 = arith.constant 0 : index
      %c0_14 = arith.constant 0 : index
      %19 = vector.load %arg7[%c0_13, %c0_14] : memref<8x128xf32, #tpu.memory_space<vmem>>, vector<8x128xf32>
      tpu.vector_store %arg7[%c0_13, %c0_14], %18 {strides = array<i32>} : memref<8x128xf32, #tpu.memory_space<vmem>>, vector<8x128xf32>,
    } else {
    }
    return
  }
  func.func @transform_0(%arg0: i32, %arg1: i32, %arg2: i32) -> (i32, i32) {
    %c0_i32 = arith.constant 0 : i32
    return %arg0, %arg2 : i32, i32
  }
  func.func @transform_1(%arg0: i32, %arg1: i32, %arg2: i32) -> (i32, i32) {
    %c0_i32 = arith.constant 0 : i32
    return %arg2, %arg1 : i32, i32
  }
  func.func @transform_2(%arg0: i32, %arg1: i32, %arg2: i32) -> (i32, i32) {
    %c0_i32 = arith.constant 0 : i32
    %c0_i32_0 = arith.constant 0 : i32
    return %c0_i32, %arg1 : i32, i32
  }
  func.func @transform_3(%arg0: i32, %arg1: i32, %arg2: i32) -> (i32, i32) {
    %c0_i32 = arith.constant 0 : i32
    %c0_i32_0 = arith.constant 0 : i32
    return %c0_i32, %arg1 : i32, i32
  }
  func.func @transform_4(%arg0: i32, %arg1: i32, %arg2: i32) -> (i32, i32) {
    %c0_i32 = arith.constant 0 : i32
    return %arg0, %arg1 : i32, i32
  }
}

</mosaic_0001>

<llo_original>
// kernel: tpu_custom_call.1
$region0: #{tpu_custom_call.1}
  #allocation0 [shape = 'u32[]', space=smem, size = 0x4, offset = 0x4, fixed_abs, tag = 'smem constant byte address 0x4 - core index']
  #allocation1 [shape = 'u32[144,128]{1,0:T(1,128)}', space=vmem, size = 0x12000, scoped, tag = 'internal scratch']
  #allocation2 [shape = 'f32[8,128]{1,0:T(8,128)}', space=vmem, size = 0x1000, scoped, tag = 'scratch operand']
  %s0 = inlined_call_operand.hbm [shape: f32[8,1024], index: 0, kind: input, shape index: {}]
  %s1 = inlined_call_operand.hbm [shape: f32[1024,128], index: 1, kind: input, shape index: {}]
  %s2 = inlined_call_operand.vmem [shape: f32[1,128], index: 2, kind: input, shape index: {}]
  %s3 = inlined_call_operand.vmem [shape: f32[1,128], index: 3, kind: input, shape index: {}]
  %s4 = inlined_call_operand.hbm [shape: f32[8,128], index: 4, kind: output, shape index: {}]
  %s5 = sld [smem:[#allocation0]]
  $region69: #{tpu_custom_call.1} parent=0
    _
  %s7 = ssub.s32 1, %s5
  %s8 = scalar_select 0, %s7, %s5
  $region1: #{tpu_custom_call.1} parent=0
    #allocation3 [shape = 'u8[32768]{0}', space=vmem, size = 0x8000, scoped, tag = 'input window, operand 0']
    #allocation4 [shape = 's32[2]{0}', space=sflag, size = 0x8, scoped, tag = 'scoped memory for tpu_custom_call.1']
    #allocation5 [shape = 's32[2]{0}', space=sflag, size = 0x8, scoped, tag = 'scoped memory for tpu_custom_call.1']
    #allocation6 [shape = 'u8[524288]{0}', space=vmem, size = 0x80000, scoped, tag = 'input window, operand 1']
    #allocation7 [shape = 's32[2]{0}', space=sflag, size = 0x8, scoped, tag = 'scoped memory for tpu_custom_call.1']
    #allocation8 [shape = 'u8[4096]{0}', space=vmem, size = 0x1000, scoped, tag = 'output window, operand 0, single buffered']
    %9 = vsyncpa [#allocation4], 0
    %s10 = scalar_lea.sflag [#allocation4], 1
    %11 = vsyncpa %s10, 0
    %12 = vsyncpa [#allocation7], 0
    %s13 = scalar_lea.sflag [#allocation7], 1
    %14 = vsyncpa %s13, 0
    %15 = vsyncpa [#allocation5], 0
    loop: start=0, step=1, limit=4
    $region2: #{tpu_custom_call.1} parent=1 // loop_pre_header
      _
    $region3: #{tpu_custom_call.1} parent=1 // loop_header
      %s17 = sphi 0, %s21
      %p18 = scmp.ge.s32.totalorder %s17, 4
      %s24 = sphi 0, %s43
      %s25 = sphi 0, %s39
      %s26 = sphi 0, %s35
      %s27 = sphi 0, %s24
      %s28 = sphi 0, %s25
      %s29 = sphi 0, %s26
      %s30 = sphi 0, %s27
      %s31 = sphi 0, %s28
      %s32 = sphi 0, %s29
      %s48 = sphi 0, %s50
      %s51 = sphi 0, %s48
      %s52 = sphi 0, %s51
      %s68 = sphi 0, %s52
      %s76 = sphi 0, %s78
      %s79 = sphi 0, %s76
      %s80 = sphi 0, %s79
      %s96 = sphi 0, %s80
      %s102 = sphi 0, %s104
      %s105 = sphi 0, %s102
      %s106 = sphi 0, %s105
      %s122 = sphi 0, %s106
      %s128 = sphi 0, %s130
      %s131 = sphi 0, %s128
      %s132 = sphi 0, %s131
      %s148 = sphi 0, %s132
      %s156 = sphi 0, %s158
      %s159 = sphi 0, %s156
      %s160 = sphi 0, %s159
      %s176 = sphi 0, %s160
    $region4: #{tpu_custom_call.1} parent=1 // loop_header_branch
      %20 = sbr.rel (%p18) target = $region8
    $region5: #{tpu_custom_call.1} parent=1 // loop_body
      %s22 = ssub.s32 %s17, 1
      %s23 = ssub.s32 %s17, 2
      %s33 = sadd.s32 1, %s26
      %p34 = scmp.ge.s32.totalorder %s33, 2
      %s35 = scalar_select %p34, 0, %s33
      %s36 = sadd.s32 1, %s25
      %s37 = scalar_select %p34, %s36, %s25
      %p38 = scmp.ge.s32.totalorder %s37, 1
      %s39 = scalar_select %p38, 0, %s37
      %s40 = sadd.s32 1, %s24
      %s41 = scalar_select %p38, %s40, %s24
      %p42 = scmp.ge.s32.totalorder %s41, 1
      %s43 = scalar_select %p42, 0, %s41
      %s44 = ssub.s32 %s24, %s43
      %s45 = ssub.s32 %s26, %s35
      %s46 = sor.u32 %s44, %s45
      %p47 = scmp.eq.s32.totalorder %s46, 0
      %s49 = sadd.s32 %s48, 1
      %s50 = scalar_select %p47, %s48, %s49
      %p53 = pneg %p47
      %p54 = scmp.eq.s32.totalorder %s17, 1
      %p55 = por %p53, %p54
      %p56 = scmp.ne.s32.totalorder %s48, %s51
      %p57 = scmp.eq.s32.totalorder %s17, 0
      %p58 = por %p56, %p57
      %p59 = scmp.ne.s32.totalorder %s48, %s51
      %p60 = scmp.eq.s32.totalorder %s22, 1
      %p61 = por %p59, %p60
      %p62 = scmp.ne.s32.totalorder %s51, %s52
      %p63 = scmp.eq.s32.totalorder %s22, 0
      %p64 = por %p62, %p63
      %p65 = scmp.ne.s32.totalorder %s51, %s52
      %p66 = scmp.eq.s32.totalorder %s23, 1
      %p67 = por %p65, %p66
      %p69 = scmp.ne.s32.totalorder %s52, %s68
      %p70 = scmp.eq.s32.totalorder %s23, 0
      %p71 = por %p69, %p70
      %s72 = ssub.s32 %s26, %s35
      %s73 = ssub.s32 %s25, %s39
      %s74 = sor.u32 %s72, %s73
      %p75 = scmp.eq.s32.totalorder %s74, 0
      %s77 = sadd.s32 %s76, 1
      %s78 = scalar_select %p75, %s76, %s77
      %p81 = pneg %p75
      %p82 = scmp.eq.s32.totalorder %s17, 1
      %p83 = por %p81, %p82
      %p84 = scmp.ne.s32.totalorder %s76, %s79
      %p85 = scmp.eq.s32.totalorder %s17, 0
      %p86 = por %p84, %p85
      %p87 = scmp.ne.s32.totalorder %s76, %s79
      %p88 = scmp.eq.s32.totalorder %s22, 1
      %p89 = por %p87, %p88
      %p90 = scmp.ne.s32.totalorder %s79, %s80
      %p91 = scmp.eq.s32.totalorder %s22, 0
      %p92 = por %p90, %p91
      %p93 = scmp.ne.s32.totalorder %s79, %s80
      %p94 = scmp.eq.s32.totalorder %s23, 1
      %p95 = por %p93, %p94
      %p97 = scmp.ne.s32.totalorder %s80, %s96
      %p98 = scmp.eq.s32.totalorder %s23, 0
      %p99 = por %p97, %p98
      %s100 = ssub.s32 %s25, %s39
      %p101 = scmp.eq.s32.totalorder %s100, 0
      %s103 = sadd.s32 %s102, 1
      %s104 = scalar_select %p101, %s102, %s103
      %p107 = pneg %p101
      %p108 = scmp.eq.s32.totalorder %s17, 1
      %p109 = por %p107, %p108
      %p110 = scmp.ne.s32.totalorder %s102, %s105
      %p111 = scmp.eq.s32.totalorder %s17, 0
      %p112 = por %p110, %p111
      %p113 = scmp.ne.s32.totalorder %s102, %s105
      %p114 = scmp.eq.s32.totalorder %s22, 1
      %p115 = por %p113, %p114
      %p116 = scmp.ne.s32.totalorder %s105, %s106
      %p117 = scmp.eq.s32.totalorder %s22, 0
      %p118 = por %p116, %p117
      %p119 = scmp.ne.s32.totalorder %s105, %s106
      %p120 = scmp.eq.s32.totalorder %s23, 1
      %p121 = por %p119, %p120
      %p123 = scmp.ne.s32.totalorder %s106, %s122
      %p124 = scmp.eq.s32.totalorder %s23, 0
      %p125 = por %p123, %p124
      %s126 = ssub.s32 %s25, %s39
      %p127 = scmp.eq.s32.totalorder %s126, 0
      %s129 = sadd.s32 %s128, 1
      %s130 = scalar_select %p127, %s128, %s129
      %p133 = pneg %p127
      %p134 = scmp.eq.s32.totalorder %s17, 1
      %p135 = por %p133, %p134
      %p136 = scmp.ne.s32.totalorder %s128, %s131
      %p137 = scmp.eq.s32.totalorder %s17, 0
      %p138 = por %p136, %p137
      %p139 = scmp.ne.s32.totalorder %s128, %s131
      %p140 = scmp.eq.s32.totalorder %s22, 1
      %p141 = por %p139, %p140
      %p142 = scmp.ne.s32.totalorder %s131, %s132
      %p143 = scmp.eq.s32.totalorder %s22, 0
      %p144 = por %p142, %p143
      %p145 = scmp.ne.s32.totalorder %s131, %s132
      %p146 = scmp.eq.s32.totalorder %s23, 1
      %p147 = por %p145, %p146
      %p149 = scmp.ne.s32.totalorder %s132, %s148
      %p150 = scmp.eq.s32.totalorder %s23, 0
      %p151 = por %p149, %p150
      %s152 = ssub.s32 %s24, %s43
      %s153 = ssub.s32 %s25, %s39
      %s154 = sor.u32 %s152, %s153
      %p155 = scmp.eq.s32.totalorder %s154, 0
      %s157 = sadd.s32 %s156, 1
      %s158 = scalar_select %p155, %s156, %s157
      %p161 = pneg %p155
      %p162 = scmp.eq.s32.totalorder %s17, 1
      %p163 = por %p161, %p162
      %p164 = scmp.ne.s32.totalorder %s156, %s159
      %p165 = scmp.eq.s32.totalorder %s17, 0
      %p166 = por %p164, %p165
      %p167 = scmp.ne.s32.totalorder %s156, %s159
      %p168 = scmp.eq.s32.totalorder %s22, 1
      %p169 = por %p167, %p168
      %p170 = scmp.ne.s32.totalorder %s159, %s160
      %p171 = scmp.eq.s32.totalorder %s22, 0
      %p172 = por %p170, %p171
      %p173 = scmp.ne.s32.totalorder %s159, %s160
      %p174 = scmp.eq.s32.totalorder %s23, 1
      %p175 = por %p173, %p174
      %p177 = scmp.ne.s32.totalorder %s160, %s176
      %p178 = scmp.eq.s32.totalorder %s23, 0
      %p179 = por %p177, %p178
      %p180 = scmp.le.s32.totalorder 1, %s17
      %p181 = scmp.lt.s32.totalorder %s17, 3
      %p182 = pnand %p180, %p181
      %p183 = pneg %p182
      // Predicated region
      $region9: #{tpu_custom_call.1} parent=5 // pred_check
        _
      $region10: #{tpu_custom_call.1} parent=5 // pred_check_branch
        %185 = sbr.rel (%p182) target = $region12
      $region11: #{tpu_custom_call.1} parent=5 // pred_region
        %s186 = ssub.s32 %s17, 1
        // Predicated region
        $region13: #{tpu_custom_call.1} parent=11 // pred_check
          %p187 = pneg %p118
        $region14: #{tpu_custom_call.1} parent=11 // pred_check_branch
          %189 = sbr.rel (%p187) target = $region16
        $region15: #{tpu_custom_call.1} parent=11 // pred_region
          %p190 = scmp.lt.s32.totalorder %s28, 0
          %s191 = scalar_select %p190, %s28, 0
          %s192 = scalar_lea.vmem %s2, %s191
        $region16: #{tpu_custom_call.1} parent=11 // pred_fallthru
          _
        // Predicated region
        $region17: #{tpu_custom_call.1} parent=11 // pred_check
          %p193 = pneg %p144
        $region18: #{tpu_custom_call.1} parent=11 // pred_check_branch
          %195 = sbr.rel (%p193) target = $region20
        $region19: #{tpu_custom_call.1} parent=11 // pred_region
          %p196 = scmp.lt.s32.totalorder %s28, 0
          %s197 = scalar_select %p196, %s28, 0
          %s198 = scalar_lea.vmem %s3, %s197
        $region20: #{tpu_custom_call.1} parent=11 // pred_fallthru
          _
      $region12: #{tpu_custom_call.1} parent=5 // pred_fallthru
        _
      %p199 = scmp.lt.s32.totalorder %s17, 2
      // Predicated region
      $region21: #{tpu_custom_call.1} parent=5 // pred_check
        %p200 = pneg %p199
      $region22: #{tpu_custom_call.1} parent=5 // pred_check_branch
        %202 = sbr.rel (%p200) target = $region24
      $region23: #{tpu_custom_call.1} parent=5 // pred_region
        // Predicated region
        $region25: #{tpu_custom_call.1} parent=23 // pred_check
          %p203 = pneg %p58
        $region26: #{tpu_custom_call.1} parent=23 // pred_check_branch
          %205 = sbr.rel (%p203) target = $region28
        $region27: #{tpu_custom_call.1} parent=23 // pred_region
          %s206 = sand.u32 %s48, 1
          %s207 = scalar_lea.sflag [#allocation4], %s206
          %s208 = sand.u32 %s48, 1
          %s209 = smul.addr %s208, 32
          %s210 = scalar_lea.vmem [#allocation3], %s209
          %s211 = smul.u32 4, %s26
          %s213 = ssub.s32 512, 512
          %214 = vsyncadd %s207, %s213
          %s215 = smul.addr %s24, 8
          %s216 = sadd.s32 %s211, %s215
          %s217 = smul.addr %s216, 128
          %s218 = scalar_lea.hbm %s0, %s217
          %s220 = sshll.u32 %s210, 4
          %s221 = int_to_ptr.vmem [resolvable:$true] %s220
          %223 = dma.hbm_to_vmem [thread:$0]  %s218, 512, %s221, %s207
        $region28: #{tpu_custom_call.1} parent=23 // pred_fallthru
          _
        // Predicated region
        $region29: #{tpu_custom_call.1} parent=23 // pred_check
          %p224 = pneg %p86
        $region30: #{tpu_custom_call.1} parent=23 // pred_check_branch
          %226 = sbr.rel (%p224) target = $region32
        $region31: #{tpu_custom_call.1} parent=23 // pred_region
          %s227 = sand.u32 %s76, 1
          %s228 = scalar_lea.sflag [#allocation7], %s227
          %s229 = sand.u32 %s76, 1
          %s230 = smul.addr %s229, 512
          %s231 = scalar_lea.vmem [#allocation6], %s230
          %s232 = smul.u32 64, %s26
          %s234 = ssub.s32 8192, 8192
          %235 = vsyncadd %s228, %s234
          %s236 = sadd.s32 %s25, %s232
          %s237 = smul.addr %s236, 128
          %s238 = scalar_lea.hbm %s1, %s237
          %s239 = sshll.u32 %s231, 4
          %s240 = int_to_ptr.vmem [resolvable:$true] %s239
          %245 = dma.hbm_to_vmem [thread:$0]  %s238, 8192, %s240, %s228, 128, 128, 8
        $region32: #{tpu_custom_call.1} parent=23 // pred_fallthru
          _
      $region24: #{tpu_custom_call.1} parent=5 // pred_fallthru
        _
      %p246 = scmp.le.s32.totalorder 1, %s17
      %p247 = scmp.lt.s32.totalorder %s17, 3
      %p248 = pnand %p246, %p247
      %p249 = pneg %p248
      // Predicated region
      $region33: #{tpu_custom_call.1} parent=5 // pred_check
        _
      $region34: #{tpu_custom_call.1} parent=5 // pred_check_branch
        %251 = sbr.rel (%p248) target = $region36
      $region35: #{tpu_custom_call.1} parent=5 // pred_region
        %s252 = ssub.s32 %s17, 1
        %s253 = sand.u32 %s51, 1
        %s254 = scalar_lea.sflag [#allocation4], %s253
        %s255 = sand.u32 %s51, 1
        %s256 = smul.addr %s255, 32
        %s257 = scalar_lea.vmem [#allocation3], %s256
        // Predicated region
        $region37: #{tpu_custom_call.1} parent=35 // pred_check
          %p258 = pneg %p64
        $region38: #{tpu_custom_call.1} parent=35 // pred_check_branch
          %260 = sbr.rel (%p258) target = $region40
        $region39: #{tpu_custom_call.1} parent=35 // pred_region
          %261 = dma.done %s254, 512
        $region40: #{tpu_custom_call.1} parent=35 // pred_fallthru
          _
        %s262 = sand.u32 %s79, 1
        %s263 = scalar_lea.sflag [#allocation7], %s262
        %s264 = sand.u32 %s79, 1
        %s265 = smul.addr %s264, 512
        %s266 = scalar_lea.vmem [#allocation6], %s265
        // Predicated region
        $region41: #{tpu_custom_call.1} parent=35 // pred_check
          %p267 = pneg %p92
        $region42: #{tpu_custom_call.1} parent=35 // pred_check_branch
          %269 = sbr.rel (%p267) target = $region44
        $region43: #{tpu_custom_call.1} parent=35 // pred_region
          %270 = dma.done %s263, 8192
        $region44: #{tpu_custom_call.1} parent=35 // pred_fallthru
          _
        %s271 = sand.u32 %s51, 1
        %s272 = scalar_lea.sflag [#allocation4], %s271
        %s273 = sand.u32 %s51, 1
        %s274 = smul.addr %s273, 32
        %s275 = scalar_lea.vmem [#allocation3], %s274
        %p276 = pneg %p64
        %p277 = pneg %p61
        %s278 = sand.u32 %s79, 1
        %s279 = scalar_lea.sflag [#allocation7], %s278
        %s280 = sand.u32 %s79, 1
        %s281 = smul.addr %s280, 512
        %s282 = scalar_lea.vmem [#allocation6], %s281
        %p283 = pneg %p92
        %p284 = pneg %p89
        %p285 = scmp.lt.s32.totalorder %s28, 0
        %s286 = scalar_select %p285, %s28, 0
        %s287 = scalar_lea.vmem %s2, %s286
        %p288 = pneg %p118
        %p289 = pneg %p115
        %p290 = scmp.lt.s32.totalorder %s28, 0
        %s291 = scalar_select %p290, %s28, 0
        %s292 = scalar_lea.vmem %s3, %s291
        %p293 = pneg %p144
        %p294 = pneg %p141
        %p295 = pneg %p172
        %p296 = pneg %p169
        %s297 = smul.u32 4, %s29
        %s298 = smul.u32 64, %s29
        %p299 = scmp.lt.s32.totalorder %s28, 0
        %s300 = scalar_select %p299, %s28, 0
        %s301 = scalar_lea.vmem %s2, %s300
        %p302 = scmp.lt.s32.totalorder %s28, 0
        %s303 = scalar_select %p302, %s28, 0
        %s304 = scalar_lea.vmem %s3, %s303
        %v305 = vld [vmem:[%s257] sm:$0xff]
        %v306 = vld [vmem:[%s257 + $0x8] sm:$0xff]
        %v307 = vld [vmem:[%s257 + $0x10] sm:$0xff]
        %v308 = vld [vmem:[%s257 + $0x18] sm:$0xff]
        %v309 = vld [vmem:[%s266] sm:$0xff]
        %v310 = vld [vmem:[%s266 + $0x8] sm:$0xff]
        %v311 = vld [vmem:[%s266 + $0x10] sm:$0xff]
        %v312 = vld [vmem:[%s266 + $0x18] sm:$0xff]
        %v313 = vld [vmem:[%s266 + $0x20] sm:$0xff]
        %v314 = vld [vmem:[%s266 + $0x28] sm:$0xff]
        %v315 = vld [vmem:[%s266 + $0x30] sm:$0xff]
        %v316 = vld [vmem:[%s266 + $0x38] sm:$0xff]
        %v317 = vld [vmem:[%s266 + $0x40] sm:$0xff]
        %v318 = vld [vmem:[%s266 + $0x48] sm:$0xff]
        %v319 = vld [vmem:[%s266 + $0x50] sm:$0xff]
        %v320 = vld [vmem:[%s266 + $0x58] sm:$0xff]
        %v321 = vld [vmem:[%s266 + $0x60] sm:$0xff]
        %v322 = vld [vmem:[%s266 + $0x68] sm:$0xff]
        %v323 = vld [vmem:[%s266 + $0x70] sm:$0xff]
        %v324 = vld [vmem:[%s266 + $0x78] sm:$0xff]
        %v325 = vld [vmem:[%s266 + $0x80] sm:$0xff]
        %v326 = vld [vmem:[%s266 + $0x88] sm:$0xff]
        %v327 = vld [vmem:[%s266 + $0x90] sm:$0xff]
        %v328 = vld [vmem:[%s266 + $0x98] sm:$0xff]
        %v329 = vld [vmem:[%s266 + $0xa0] sm:$0xff]
        %v330 = vld [vmem:[%s266 + $0xa8] sm:$0xff]
        %v331 = vld [vmem:[%s266 + $0xb0] sm:$0xff]
        %v332 = vld [vmem:[%s266 + $0xb8] sm:$0xff]
        %v333 = vld [vmem:[%s266 + $0xc0] sm:$0xff]
        %v334 = vld [vmem:[%s266 + $0xc8] sm:$0xff]
        %v335 = vld [vmem:[%s266 + $0xd0] sm:$0xff]
        %v336 = vld [vmem:[%s266 + $0xd8] sm:$0xff]
        %v337 = vld [vmem:[%s266 + $0xe0] sm:$0xff]
        %v338 = vld [vmem:[%s266 + $0xe8] sm:$0xff]
        %v339 = vld [vmem:[%s266 + $0xf0] sm:$0xff]
        %v340 = vld [vmem:[%s266 + $0xf8] sm:$0xff]
        %v341 = vld [vmem:[%s266 + $0x100] sm:$0xff]
        %v342 = vld [vmem:[%s266 + $0x108] sm:$0xff]
        %v343 = vld [vmem:[%s266 + $0x110] sm:$0xff]
        %v344 = vld [vmem:[%s266 + $0x118] sm:$0xff]
        %v345 = vld [vmem:[%s266 + $0x120] sm:$0xff]
        %v346 = vld [vmem:[%s266 + $0x128] sm:$0xff]
        %v347 = vld [vmem:[%s266 + $0x130] sm:$0xff]
        %v348 = vld [vmem:[%s266 + $0x138] sm:$0xff]
        %v349 = vld [vmem:[%s266 + $0x140] sm:$0xff]
        %v350 = vld [vmem:[%s266 + $0x148] sm:$0xff]
        %v351 = vld [vmem:[%s266 + $0x150] sm:$0xff]
        %v352 = vld [vmem:[%s266 + $0x158] sm:$0xff]
        %v353 = vld [vmem:[%s266 + $0x160] sm:$0xff]
        %v354 = vld [vmem:[%s266 + $0x168] sm:$0xff]
        %v355 = vld [vmem:[%s266 + $0x170] sm:$0xff]
        %v356 = vld [vmem:[%s266 + $0x178] sm:$0xff]
        %v357 = vld [vmem:[%s266 + $0x180] sm:$0xff]
        %v358 = vld [vmem:[%s266 + $0x188] sm:$0xff]
        %v359 = vld [vmem:[%s266 + $0x190] sm:$0xff]
        %v360 = vld [vmem:[%s266 + $0x198] sm:$0xff]
        %v361 = vld [vmem:[%s266 + $0x1a0] sm:$0xff]
        %v362 = vld [vmem:[%s266 + $0x1a8] sm:$0xff]
        %v363 = vld [vmem:[%s266 + $0x1b0] sm:$0xff]
        %v364 = vld [vmem:[%s266 + $0x1b8] sm:$0xff]
        %v365 = vld [vmem:[%s266 + $0x1c0] sm:$0xff]
        %v366 = vld [vmem:[%s266 + $0x1c8] sm:$0xff]
        %v367 = vld [vmem:[%s266 + $0x1d0] sm:$0xff]
        %v368 = vld [vmem:[%s266 + $0x1d8] sm:$0xff]
        %v369 = vld [vmem:[%s266 + $0x1e0] sm:$0xff]
        %v370 = vld [vmem:[%s266 + $0x1e8] sm:$0xff]
        %v371 = vld [vmem:[%s266 + $0x1f0] sm:$0xff]
        %v372 = vld [vmem:[%s266 + $0x1f8] sm:$0xff]
        %373 = vmatprep.subr.mxu0 0.0
        %374 = vmatpush1.msra.mxu0 %v309
        %375 = vmatprep.subr.mxu0 0.0
        %376 = vmatpush1.msra.mxu0 %v310
        %377 = vmatprep.subr.mxu0 0.0
        %378 = vmatpush1.msra.mxu0 %v311
        %379 = vmatprep.subr.mxu0 0.0
        %380 = vmatpush1.msra.mxu0 %v312
        %381 = vmatprep.subr.mxu0 0.0
        %382 = vmatpush1.msra.mxu0 %v313
        %383 = vmatprep.subr.mxu0 0.0
        %384 = vmatpush1.msra.mxu0 %v314
        %385 = vmatprep.subr.mxu0 0.0
        %386 = vmatpush1.msra.mxu0 %v315
        %387 = vmatprep.subr.mxu0 0.0
        %388 = vmatpush1.msra.mxu0 %v316
        %389 = vmatprep.subr.mxu0 0.0
        %390 = vmatpush1.msra.mxu0 %v317
        %391 = vmatprep.subr.mxu0 0.0
        %392 = vmatpush1.msra.mxu0 %v318
        %393 = vmatprep.subr.mxu0 0.0
        %394 = vmatpush1.msra.mxu0 %v319
        %395 = vmatprep.subr.mxu0 0.0
        %396 = vmatpush1.msra.mxu0 %v320
        %397 = vmatprep.subr.mxu0 0.0
        %398 = vmatpush1.msra.mxu0 %v321
        %399 = vmatprep.subr.mxu0 0.0
        %400 = vmatpush1.msra.mxu0 %v322
        %401 = vmatprep.subr.mxu0 0.0
        %402 = vmatpush1.msra.mxu0 %v323
        %403 = vmatprep.subr.mxu0 0.0
        %404 = vmatpush1.msra.mxu0 %v324
        %405 = vmatprep.subr.mxu0 0.0
        %406 = vmatpush1.msra.mxu0 %v325
        %407 = vmatprep.subr.mxu0 0.0
        %408 = vmatpush1.msra.mxu0 %v326
        %409 = vmatprep.subr.mxu0 0.0
        %410 = vmatpush1.msra.mxu0 %v327
        %411 = vmatprep.subr.mxu0 0.0
        %412 = vmatpush1.msra.mxu0 %v328
        %413 = vmatprep.subr.mxu0 0.0
        %414 = vmatpush1.msra.mxu0 %v329
        %415 = vmatprep.subr.mxu0 0.0
        %416 = vmatpush1.msra.mxu0 %v330
        %417 = vmatprep.subr.mxu0 0.0
        %418 = vmatpush1.msra.mxu0 %v331
        %419 = vmatprep.subr.mxu0 0.0
        %420 = vmatpush1.msra.mxu0 %v332
        %421 = vmatprep.subr.mxu0 0.0
        %422 = vmatpush1.msra.mxu0 %v333
        %423 = vmatprep.subr.mxu0 0.0
        %424 = vmatpush1.msra.mxu0 %v334
        %425 = vmatprep.subr.mxu0 0.0
        %426 = vmatpush1.msra.mxu0 %v335
        %427 = vmatprep.subr.mxu0 0.0
        %428 = vmatpush1.msra.mxu0 %v336
        %429 = vmatprep.subr.mxu0 0.0
        %430 = vmatpush1.msra.mxu0 %v337
        %431 = vmatprep.subr.mxu0 0.0
        %432 = vmatpush1.msra.mxu0 %v338
        %433 = vmatprep.subr.mxu0 0.0
        %434 = vmatpush1.msra.mxu0 %v339
        %435 = vmatprep.subr.mxu0 0.0
        %436 = vmatpush1.msra.mxu0 %v340
        %437 = vmatprep.mubr.f32.mxu0 %v306
        %438 = vmatmul.mubr.f32.gmra.mrb[0].mxu0 %v305
        %v439 = vpop.f32.mrb[0].mxu0
        %v440 = vadd.f32 0.0, %v439
        %v441 = vpop.f32.mrb[0].mxu0
        %442 = vdwg.mxu0
        %443 = vmatprep.subr.mxu0 0.0
        %444 = vmatpush1.msra.mxu0 %v341
        %445 = vmatprep.subr.mxu0 0.0
        %446 = vmatpush1.msra.mxu0 %v342
        %447 = vmatprep.subr.mxu0 0.0
        %448 = vmatpush1.msra.mxu0 %v343
        %449 = vmatprep.subr.mxu0 0.0
        %450 = vmatpush1.msra.mxu0 %v344
        %451 = vmatprep.subr.mxu0 0.0
        %452 = vmatpush1.msra.mxu0 %v345
        %453 = vmatprep.subr.mxu0 0.0
        %454 = vmatpush1.msra.mxu0 %v346
        %455 = vmatprep.subr.mxu0 0.0
        %456 = vmatpush1.msra.mxu0 %v347
        %457 = vmatprep.subr.mxu0 0.0
        %458 = vmatpush1.msra.mxu0 %v348
        %459 = vmatprep.subr.mxu0 0.0
        %460 = vmatpush1.msra.mxu0 %v349
        %461 = vmatprep.subr.mxu0 0.0
        %462 = vmatpush1.msra.mxu0 %v350
        %463 = vmatprep.subr.mxu0 0.0
        %464 = vmatpush1.msra.mxu0 %v351
        %465 = vmatprep.subr.mxu0 0.0
        %466 = vmatpush1.msra.mxu0 %v352
        %467 = vmatprep.subr.mxu0 0.0
        %468 = vmatpush1.msra.mxu0 %v353
        %469 = vmatprep.subr.mxu0 0.0
        %470 = vmatpush1.msra.mxu0 %v354
        %471 = vmatprep.subr.mxu0 0.0
        %472 = vmatpush1.msra.mxu0 %v355
        %473 = vmatprep.subr.mxu0 0.0
        %474 = vmatpush1.msra.mxu0 %v356
        %475 = vmatprep.subr.mxu0 0.0
        %476 = vmatpush1.msra.mxu0 %v357
        %477 = vmatprep.subr.mxu0 0.0
        %478 = vmatpush1.msra.mxu0 %v358
        %479 = vmatprep.subr.mxu0 0.0
        %480 = vmatpush1.msra.mxu0 %v359
        %481 = vmatprep.subr.mxu0 0.0
        %482 = vmatpush1.msra.mxu0 %v360
        %483 = vmatprep.subr.mxu0 0.0
        %484 = vmatpush1.msra.mxu0 %v361
        %485 = vmatprep.subr.mxu0 0.0
        %486 = vmatpush1.msra.mxu0 %v362
        %487 = vmatprep.subr.mxu0 0.0
        %488 = vmatpush1.msra.mxu0 %v363
        %489 = vmatprep.subr.mxu0 0.0
        %490 = vmatpush1.msra.mxu0 %v364
        %491 = vmatprep.subr.mxu0 0.0
        %492 = vmatpush1.msra.mxu0 %v365
        %493 = vmatprep.subr.mxu0 0.0
        %494 = vmatpush1.msra.mxu0 %v366
        %495 = vmatprep.subr.mxu0 0.0
        %496 = vmatpush1.msra.mxu0 %v367
        %497 = vmatprep.subr.mxu0 0.0
        %498 = vmatpush1.msra.mxu0 %v368
        %499 = vmatprep.subr.mxu0 0.0
        %500 = vmatpush1.msra.mxu0 %v369
        %501 = vmatprep.subr.mxu0 0.0
        %502 = vmatpush1.msra.mxu0 %v370
        %503 = vmatprep.subr.mxu0 0.0
        %504 = vmatpush1.msra.mxu0 %v371
        %505 = vmatprep.subr.mxu0 0.0
        %506 = vmatpush1.msra.mxu0 %v372
        %507 = vmatprep.mubr.f32.mxu0 %v308
        %508 = vmatmul.mubr.f32.gmra.mrb[0].mxu0 %v307
        %v509 = vpop.f32.mrb[0].mxu0
        %v510 = vadd.f32 %v440, %v509
        %v511 = vpop.f32.mrb[0].mxu0
        %512 = vdwg.mxu0
        %p513 = scmp.eq.s32.totalorder %s29, 0
        // Predicated region
        $region45: #{tpu_custom_call.1} parent=35 // pred_check
          %p514 = pneg %p513
        $region46: #{tpu_custom_call.1} parent=35 // pred_check_branch
          %516 = sbr.rel (%p514) target = $region48
        $region47: #{tpu_custom_call.1} parent=35 // pred_region
          %517 = vst [vmem:[#allocation2] sm:$0xff] %v510
        $region48: #{tpu_custom_call.1} parent=35 // pred_fallthru
          _
        %p518 = scmp.gt.s32.totalorder %s29, 0
        // Predicated region
        $region49: #{tpu_custom_call.1} parent=35 // pred_check
          %p519 = pneg %p518
        $region50: #{tpu_custom_call.1} parent=35 // pred_check_branch
          %521 = sbr.rel (%p519) target = $region52
        $region51: #{tpu_custom_call.1} parent=35 // pred_region
          %v522 = vld [vmem:[#allocation2] sm:$0xff]
          %v523 = vadd.f32 %v522, %v510
          %524 = vst [vmem:[#allocation2] sm:$0xff] %v523
        $region52: #{tpu_custom_call.1} parent=35 // pred_fallthru
          _
        %p525 = scmp.eq.s32.totalorder %s29, 1
        // Predicated region
        $region53: #{tpu_custom_call.1} parent=35 // pred_check
          %p526 = pneg %p525
        $region54: #{tpu_custom_call.1} parent=35 // pred_check_branch
          %528 = sbr.rel (%p526) target = $region56
        $region55: #{tpu_custom_call.1} parent=35 // pred_region
          %v529 = vld [vmem:[#allocation2] sm:$0xff]
          %v530 = vld [vmem:[%s301] sm:$0x1]
          %v532 = vlaneseq
          %v533 = vshrl.u32 %v532, 7
          %v534 = vsub.s32 0, %v533
          %v535 = vrot.slane %v530, %v534
          %v537 = vmul.f32 %v529, %v535
          %v538 = vld [vmem:[%s304] sm:$0x1]
          %v540 = vlaneseq
          %v541 = vshrl.u32 %v540, 7
          %v542 = vsub.s32 0, %v541
          %v543 = vrot.slane %v538, %v542
          %v545 = vsub.f32 %v537, %v543
          %546 = vst [vmem:[#allocation8] sm:$0xff] %v545
        $region56: #{tpu_custom_call.1} parent=35 // pred_fallthru
          _
        // Predicated region
        $region57: #{tpu_custom_call.1} parent=35 // pred_check
          %p547 = pneg %p169
        $region58: #{tpu_custom_call.1} parent=35 // pred_check_branch
          %549 = sbr.rel (%p547) target = $region60
        $region59: #{tpu_custom_call.1} parent=35 // pred_region
          %s551 = ssub.s32 128, 128
          %552 = vsyncadd [#allocation5], %s551
          %s553 = sadd.s32 %s28, %s27
          %s554 = smul.addr %s553, 128
          %s555 = scalar_lea.hbm %s4, %s554
          %s557 = sshll.u32 [#allocation8], 4
          %s558 = int_to_ptr.vmem [resolvable:$true] %s557
          %560 = dma.vmem_to_hbm [thread:$0]  %s558, 128, %s555, [#allocation5]
        $region60: #{tpu_custom_call.1} parent=35 // pred_fallthru
          _
        // Predicated region
        $region61: #{tpu_custom_call.1} parent=35 // pred_check
          %p561 = pneg %p169
        $region62: #{tpu_custom_call.1} parent=35 // pred_check_branch
          %563 = sbr.rel (%p561) target = $region64
        $region63: #{tpu_custom_call.1} parent=35 // pred_region
          %564 = dma.done [#allocation5], 128
        $region64: #{tpu_custom_call.1} parent=35 // pred_fallthru
          _
      $region36: #{tpu_custom_call.1} parent=5 // pred_fallthru
        _
      %p565 = scmp.le.s32.totalorder 2, %s17
      // Predicated region
      $region65: #{tpu_custom_call.1} parent=5 // pred_check
        %p566 = pneg %p565
      $region66: #{tpu_custom_call.1} parent=5 // pred_check_branch
        %568 = sbr.rel (%p566) target = $region68
      $region67: #{tpu_custom_call.1} parent=5 // pred_region
        %s569 = ssub.s32 %s17, 2
      $region68: #{tpu_custom_call.1} parent=5 // pred_fallthru
        _
    $region6: #{tpu_custom_call.1} parent=1 // loop_footer
      %s21 = sadd.s32 1, %s17
    $region7: #{tpu_custom_call.1} parent=1 // loop_footer_branch
      %16 = sbr.rel target = $region3
    $region8: #{tpu_custom_call.1} parent=1 // loop_exit
      _
    %570 = vsyncpa [#allocation4], 1
    %s571 = scalar_lea.sflag [#allocation4], 1
    %572 = vsyncpa %s571, 1
    %573 = vsyncpa [#allocation7], 1
    %s574 = scalar_lea.sflag [#allocation7], 1
    %575 = vsyncpa %s574, 1
    %576 = vsyncpa [#allocation5], 1
    %s577 = scalar_lea.sflag [#allocation5], 1
    %578 = vsyncpa %s577, 1

</llo_original>
